<compile_context>
chip_gen: v5e
topology: v5e:2x2
jax: 0.10.0
libtpu: 0.0.40
codegen_flags: <defaults>
</compile_context>

<pallas_src>
import jax
import jax.numpy as jnp
from jax.experimental import pallas as pl
from jax.experimental.pallas import tpu as pltpu


# Blocks are double-buffered by the pipeline.  Size them against 24 MiB so they fit
# every generation (v7x: 64 MiB physical VMEM per TC), and raise the scoped VMEM
# limit to 48 MiB (v5e's default scoped limit is only 16 MiB).
_BLOCK_BUDGET_BYTES = 24 << 20
_VMEM_LIMIT_BYTES = 48 << 20
_MAX_UNROLL = 32  # cap on statically-unrolled images per step in the flat path


def _round_up(x, m):
    return (x + m - 1) // m * m


def _largest_divisor_le(n, cap):
    best = 1
    for d in range(1, min(n, max(1, cap)) + 1):
        if n % d == 0:
            best = d
    return best


def _make_flat_kernel(tb, c, aug, hw):
    """Channels folded into sublanes: x_ref (tb*c, hw) -> o_ref (tb*aug, hw)."""

    def kernel(x_ref, o_ref):
        if aug == c:  # static: pure copy
            o_ref[...] = x_ref[...].astype(o_ref.dtype)
            return
        zero_rows = jnp.zeros((aug - c, hw), o_ref.dtype)  # hoisted, reused each image
        for b in range(tb):  # static unrolled loop; static slices are free views
            # first C rows of image b <- input channels (cast to f32, torch .float())
            o_ref[b * aug:b * aug + c, :] = x_ref[b * c:(b + 1) * c, :].astype(o_ref.dtype)
            # remaining (aug - C) rows <- 0   (each output row written exactly once)
            o_ref[b * aug + c:(b + 1) * aug, :] = zero_rows

    return kernel


def _batched_kernel_3d(x_ref, o_ref):
    """Fallback: x_ref (tb, C, hw) -> o_ref (tb, aug, hw)."""
    tb, c, hw = x_ref.shape
    _, aug, _ = o_ref.shape
    o_ref[:, :c, :] = x_ref[...].astype(o_ref.dtype)
    if aug > c:  # static
        o_ref[:, c:, :] = jnp.zeros((tb, aug - c, hw), o_ref.dtype)


def anode_initial_velocity_forward(x0, aug):
    """x0: [B, C, H, W] (C == 3 per the module's `out[:, :, :3] += x0`).
    Returns float32 [B, 1, aug, H, W]."""
    B, C, H, W = x0.shape
    assert aug >= C, "aug must be >= number of input channels"
    HW = H * W
    in_item = jnp.dtype(x0.dtype).itemsize

    cparams = pltpu.CompilerParams(
        dimension_semantics=("parallel",),      # megacore sharding on multi-TC chips
        vmem_limit_bytes=_VMEM_LIMIT_BYTES,     # v5e default(16 MiB) < this < v7x phys(64 MiB)
    )
    cost = pl.CostEstimate(
        flops=0,
        transcendentals=0,
        bytes_accessed=B * C * HW * in_item + B * aug * HW * 4,
    )

    # ---- Path A: sublane-dense flat layout, fattened batch tile -----------------
    per_img_flat = HW * (C * in_item + aug * 4)
    max_tb = max(1, _BLOCK_BUDGET_BYTES // (2 * per_img_flat))
    tb = _largest_divisor_le(B, min(max_tb, _MAX_UNROLL))
    # (8,128) rule: last-two block dims must be divisible by (8,128) or equal full dims.
    flat_ok = (tb == B) or (tb * C % 8 == 0 and tb * aug % 8 == 0)

    if flat_ok:
        x_flat = x0.reshape(B * C, HW)  # contiguous view, no extra HBM pass
        out_flat = pl.pallas_call(
            _make_flat_kernel(tb, C, aug, HW),
            out_shape=jax.ShapeDtypeStruct((B * aug, HW), jnp.float32),
            grid_spec=pltpu.PrefetchScalarGridSpec(
                num_scalar_prefetch=0,
                grid=(B // tb,),
                in_specs=[pl.BlockSpec((tb * C, HW), lambda i: (i, 0))],
                out_specs=pl.BlockSpec((tb * aug, HW), lambda i: (i, 0)),
            ),
            compiler_params=cparams,
            cost_estimate=cost,
        )(x_flat)
        return out_flat.reshape(B, 1, aug, H, W)  # free contiguous reshape

    # ---- Path B: 3-D blocks (always layout-legal), still batch-fattened ---------
    per_img_3d = HW * (_round_up(C, 8) * in_item + _round_up(aug, 8) * 4)
    tb3 = _largest_divisor_le(B, max(1, _BLOCK_BUDGET_BYTES // (2 * per_img_3d)))
    x3 = x0.reshape(B, C, HW)
    out3 = pl.pallas_call(
        _batched_kernel_3d,
        out_shape=jax.ShapeDtypeStruct((B, aug, HW), jnp.float32),
        grid_spec=pltpu.PrefetchScalarGridSpec(
            num_scalar_prefetch=0,
            grid=(B // tb3,),
            in_specs=[pl.BlockSpec((tb3, C, HW), lambda i: (i, 0, 0))],
            out_specs=pl.BlockSpec((tb3, aug, HW), lambda i: (i, 0, 0)),
        ),
        compiler_params=cparams,
        cost_estimate=cost,
    )(x3)
    return out3.reshape(B, 1, aug, H, W)
    # TODO(synk): `.to(self.args.gpu)` device placement has no Pallas equivalent;
    # device placement is handled by JAX outside the kernel.


if __name__ == "__main__":
    # Small shapes consistent with the module: in_channels=3 (forward hard-codes
    # out[:, :, :3] += x0), batch=2, spatial=16, aug=5 augmented channels.
    B, C, H, W = 2, 3, 16, 16
    AUG = 5

    key = jax.random.PRNGKey(0)
    x0 = jax.random.normal(key, (B, C, H, W), dtype=jnp.float32)

    out = anode_initial_velocity_forward(x0, AUG)
    out = jax.block_until_ready(out)

    # Plain-JAX reference mirroring the PyTorch forward exactly.
    ref = jnp.zeros((B, 1, AUG, H, W), jnp.float32)
    ref = ref.at[:, :, :C].add(x0.astype(jnp.float32)[:, None])

    assert out.shape == (B, 1, AUG, H, W)
    assert out.dtype == jnp.float32
    assert jnp.allclose(out, ref, atol=1e-6, rtol=0.0)

    print("KERNEL_OK")
</pallas_src>

<mosaic_0001>
module attributes {stable_mosaic.version = 11 : i64} {
  func.func @kernel(%arg0: i32, %arg1: memref<6x256xf32, #tpu.memory_space<vmem>>, %arg2: memref<10x256xf32, #tpu.memory_space<vmem>>) attributes {dimension_semantics = [#tpu.dimension_semantics<parallel>], iteration_bounds = array<i64: 1>, scalar_prefetch = 0 : i64, scratch_operands = 0 : i64, tpu.core_type = #tpu.core_type<tc>, window_params = [{transform_indices = @transform_0, window_bounds = array<i64: 6, 256>}, {transform_indices = @transform_1, window_bounds = array<i64: 10, 256>}]} {
    %cst = arith.constant 0.000000e+00 : f32
    %0 = vector.broadcast %cst : f32 to vector<2x256xf32>
    %c0 = arith.constant 0 : index
    %c0_0 = arith.constant 0 : index
    %1 = vector.load %arg1[%c0, %c0_0] : memref<6x256xf32, #tpu.memory_space<vmem>>, vector<3x256xf32>
    %c0_1 = arith.constant 0 : index
    %c0_2 = arith.constant 0 : index
    %2 = vector.load %arg2[%c0_1, %c0_2] : memref<10x256xf32, #tpu.memory_space<vmem>>, vector<3x256xf32>
    tpu.vector_store %arg2[%c0_1, %c0_2], %1 {strides = array<i32>} : memref<10x256xf32, #tpu.memory_space<vmem>>, vector<3x256xf32>,
    %c3 = arith.constant 3 : index
    %c0_3 = arith.constant 0 : index
    %3 = vector.load %arg2[%c3, %c0_3] : memref<10x256xf32, #tpu.memory_space<vmem>>, vector<2x256xf32>
    tpu.vector_store %arg2[%c3, %c0_3], %0 {strides = array<i32>} : memref<10x256xf32, #tpu.memory_space<vmem>>, vector<2x256xf32>,
    %c3_4 = arith.constant 3 : index
    %c0_5 = arith.constant 0 : index
    %4 = vector.load %arg1[%c3_4, %c0_5] : memref<6x256xf32, #tpu.memory_space<vmem>>, vector<3x256xf32>
    %c5 = arith.constant 5 : index
    %c0_6 = arith.constant 0 : index
    %5 = vector.load %arg2[%c5, %c0_6] : memref<10x256xf32, #tpu.memory_space<vmem>>, vector<3x256xf32>
    tpu.vector_store %arg2[%c5, %c0_6], %4 {strides = array<i32>} : memref<10x256xf32, #tpu.memory_space<vmem>>, vector<3x256xf32>,
    %c8 = arith.constant 8 : index
    %c0_7 = arith.constant 0 : index
    %6 = vector.load %arg2[%c8, %c0_7] : memref<10x256xf32, #tpu.memory_space<vmem>>, vector<2x256xf32>
    tpu.vector_store %arg2[%c8, %c0_7], %0 {strides = array<i32>} : memref<10x256xf32, #tpu.memory_space<vmem>>, vector<2x256xf32>,
    return
  }
  func.func @transform_0(%arg0: i32) -> (i32, i32) {
    %c0_i32 = arith.constant 0 : i32
    %c0_i32_0 = arith.constant 0 : i32
    return %arg0, %c0_i32 : i32, i32
  }
  func.func @transform_1(%arg0: i32) -> (i32, i32) {
    %c0_i32 = arith.constant 0 : i32
    %c0_i32_0 = arith.constant 0 : i32
    return %arg0, %c0_i32 : i32, i32
  }
}

</mosaic_0001>

<llo_original>
// kernel: tpu_custom_call.1
$region0: #{tpu_custom_call.1}
  #allocation0 [shape = 'u32[]', space=smem, size = 0x4, offset = 0x4, fixed_abs, tag = 'smem constant byte address 0x4 - core index']
  #allocation1 [shape = 'u32[72,128]{1,0:T(1,128)}', space=vmem, size = 0x9000, scoped, tag = 'internal scratch']
  %s0 = inlined_call_operand.hbm [shape: f32[6,256], index: 0, kind: input, shape index: {}]
  %s1 = inlined_call_operand.hbm [shape: f32[10,256], index: 1, kind: output, shape index: {}]
  %s2 = sld [smem:[#allocation0]]
  $region18: #{tpu_custom_call.1} parent=0
    _
  %s4 = ssub.s32 1, %s2
  %s5 = scalar_select 0, %s4, %s2
  $region1: #{tpu_custom_call.1} parent=0
    #allocation2 [shape = 'u8[8192]{0}', space=vmem, size = 0x2000, scoped, tag = 'input window, operand 0, single buffered']
    #allocation3 [shape = 's32[1]{0}', space=sflag, size = 0x4, scoped, tag = 'scoped memory for tpu_custom_call.1']
    #allocation4 [shape = 's32[1]{0}', space=sflag, size = 0x4, scoped, tag = 'scoped memory for tpu_custom_call.1']
    #allocation5 [shape = 'u8[16384]{0}', space=vmem, size = 0x4000, scoped, tag = 'output window, operand 0, single buffered']
    %6 = vsyncpa [#allocation3], 0
    %7 = vsyncpa [#allocation4], 0
    // Predicated region
    $region2: #{tpu_custom_call.1} parent=1 // pred_check
      _
    $region3: #{tpu_custom_call.1} parent=1 // pred_check_branch
      %9 = sbr.rel (0) target = $region5
    $region4: #{tpu_custom_call.1} parent=1 // pred_region
      %11 = vsyncadd [#allocation3], 0
      %s13 = sshll.u32 %s0, 4
      %s14 = int_to_ptr.hbm [resolvable:$true] %s13
      %s15 = sshll.u32 [#allocation2], 4
      %s16 = int_to_ptr.vmem [resolvable:$true] %s15
      %18 = dma.hbm_to_vmem [thread:$0]  %s14, 256, %s16, [#allocation3]
    $region5: #{tpu_custom_call.1} parent=1 // pred_fallthru
      _
    // Predicated region
    $region6: #{tpu_custom_call.1} parent=1 // pred_check
      _
    $region7: #{tpu_custom_call.1} parent=1 // pred_check_branch
      %20 = sbr.rel (0) target = $region9
    $region8: #{tpu_custom_call.1} parent=1 // pred_region
      %22 = dma.done [#allocation3], 256
    $region9: #{tpu_custom_call.1} parent=1 // pred_fallthru
      _
    %v23 = vld [vmem:[#allocation2] sm:$0x7]
    %v24 = vld [vmem:[#allocation2 + $0x8] sm:$0x7]
    %25 = vst [vmem:[#allocation5] sm:$0x7] %v23
    %26 = vst [vmem:[#allocation5 + $0x8] sm:$0x7] %v24
    %27 = vst [vmem:[#allocation5] sm:$0x18] 0.0
    %28 = vst [vmem:[#allocation5 + $0x8] sm:$0x18] 0.0
    %v29 = vld [vmem:[#allocation2] sm:$0x38]
    %v30 = vld [vmem:[#allocation2 + $0x8] sm:$0x38]
    %v33 = vrot.slane %v29, 6
    %v34 = vrot.slane %v30, 6
    %37 = vst [vmem:[#allocation5] sm:$0xe0] %v33
    %38 = vst [vmem:[#allocation5 + $0x8] sm:$0xe0] %v34
    %39 = vst [vmem:[#allocation5 + $0x10] sm:$0x3] 0.0
    %40 = vst [vmem:[#allocation5 + $0x18] sm:$0x3] 0.0
    // Predicated region
    $region10: #{tpu_custom_call.1} parent=1 // pred_check
      _
    $region11: #{tpu_custom_call.1} parent=1 // pred_check_branch
      %42 = sbr.rel (0) target = $region13
    $region12: #{tpu_custom_call.1} parent=1 // pred_region
      %44 = vsyncadd [#allocation4], 0
      %s45 = sshll.u32 [#allocation5], 4
      %s46 = int_to_ptr.vmem [resolvable:$true] %s45
      %s47 = sshll.u32 %s1, 4
      %s48 = int_to_ptr.hbm [resolvable:$true] %s47
      %53 = dma.vmem_to_hbm [thread:$0]  %s46, 512, %s48, [#allocation4], 256, 256, 16
    $region13: #{tpu_custom_call.1} parent=1 // pred_fallthru
      _
    // Predicated region
    $region14: #{tpu_custom_call.1} parent=1 // pred_check
      _
    $region15: #{tpu_custom_call.1} parent=1 // pred_check_branch
      %55 = sbr.rel (0) target = $region17
    $region16: #{tpu_custom_call.1} parent=1 // pred_region
      %57 = dma.done [#allocation4], 512
    $region17: #{tpu_custom_call.1} parent=1 // pred_fallthru
      _
    %58 = vsyncpa [#allocation3], 1
    %59 = vsyncpa [#allocation4], 1

</llo_original>
